<compile_context>
chip_gen: v6e
topology: v6e:2x2x1
jax: 0.10.0
libtpu: 0.0.40
codegen_flags: <defaults>
</compile_context>

<pallas_src>
import jax
import jax.numpy as jnp
from jax.experimental import pallas as pl
from jax.experimental.pallas import tpu as pltpu


def _round_up(n, m):
    return ((n + m - 1) // m) * m


def _mlp_kernel(x_ref, w1_ref, b1_ref, w2_ref, b2_ref, w3r_ref, b3_ref, out_ref):
    # Layer 1: (TB, C) @ (C, H) on the MXU; bias + ReLU on the VPU (f32).
    h = jnp.dot(x_ref[...], w1_ref[...], preferred_element_type=jnp.float32)
    h = jnp.maximum(h + b1_ref[...], 0.0)
    # Layer 2: (TB, H) @ (H, H).
    h = jnp.dot(h.astype(w2_ref.dtype), w2_ref[...],
                preferred_element_type=jnp.float32)
    h = jnp.maximum(h + b2_ref[...], 0.0)
    # Layer 3 (out_dim == 1): an N=1 MXU matmul uses 1/128-1/256 of the result
    # width, so do a VPU multiply + cross-lane reduce instead.
    w3r = w3r_ref[...].astype(jnp.float32)                 # (1, H)
    o = jnp.sum(h * w3r, axis=-1, keepdims=True)           # (TB, 1)
    out_ref[...] = (o + b3_ref[...]).astype(out_ref.dtype)


def amplitude_dsi_forward(inputs, type_token, global_token, params,
                          *, block_batch=512, use_bf16=False):
    """Equivalent of AmplitudeDSIWrapper.forward (tokens are unused, as in the
    reference forward pass)."""
    del type_token, global_token  # unused in the reference forward pass
    batchsize, num_components = inputs.shape  # mirrors the unpacking in forward
    w1, b1, w2, b2, w3, b3 = params
    hidden = w1.shape[1]
    out_dim = w3.shape[1]
    assert out_dim == 1, "amplitude regression head is scalar"

    # (H, 1) -> (1, H) row so layer 3 is an elementwise multiply + lane reduce.
    w3_row = w3.reshape(1, hidden)

    if use_bf16:
        # bf16 operands for the MXU (v6e/v7x native); accumulate stays f32,
        # biases / elementwise math stay f32 (v5e VPU has no bf16).
        x = inputs.astype(jnp.bfloat16)
        w1c = w1.astype(jnp.bfloat16)
        w2c = w2.astype(jnp.bfloat16)
        w3c = w3_row.astype(jnp.bfloat16)
    else:
        x, w1c, w2c, w3c = inputs, w1, w2, w3_row

    # Batch tiling: blocks must be sublane (8) aligned; pad the batch so the
    # grid divides evenly, slice the padding back off at the end.
    tb = min(block_batch, _round_up(batchsize, 8))
    tb = _round_up(tb, 8)
    padded = _round_up(batchsize, tb)
    if padded != batchsize:
        x = jnp.pad(x, ((0, padded - batchsize), (0, 0)))
    num_blocks = padded // tb

    flops = 2 * padded * (num_components * hidden + hidden * hidden + hidden)
    bytes_accessed = (
        x.size * x.dtype.itemsize
        + sum(int(p.size) * p.dtype.itemsize for p in (w1c, b1, w2c, b2, w3c, b3))
        + padded * out_dim * 4
    )

    def resident(arr):
        # Whole array as one block, same block every grid step -> stays in VMEM.
        return pl.BlockSpec(arr.shape, lambda i, _nd=arr.ndim: (0,) * _nd)

    out = pl.pallas_call(
        _mlp_kernel,
        out_shape=jax.ShapeDtypeStruct((padded, out_dim), jnp.float32),
        grid=(num_blocks,),
        in_specs=[
            pl.BlockSpec((tb, num_components), lambda i: (i, 0)),  # batch-tiled x
            resident(w1c), resident(b1),
            resident(w2c), resident(b2),
            resident(w3c), resident(b3),
        ],
        out_specs=pl.BlockSpec((tb, out_dim), lambda i: (i, 0)),
        compiler_params=pltpu.CompilerParams(
            dimension_semantics=("parallel",)),
        cost_estimate=pl.CostEstimate(
            flops=flops, transcendentals=0, bytes_accessed=bytes_accessed),
    )(x, w1c, b1, w2c, b2, w3c, b3)

    return out[:batchsize]


def make_params(num_components, hidden, out_dim=1, seed=1):
    """Deterministic synthetic MLP parameters (no checkpoint loading)."""
    k = jax.random.PRNGKey(seed)
    k1, k2, k3 = jax.random.split(k, 3)
    scale1 = 1.0 / jnp.sqrt(num_components)
    scale2 = 1.0 / jnp.sqrt(hidden)
    w1 = jax.random.normal(k1, (num_components, hidden), jnp.float32) * scale1
    b1 = jnp.zeros((1, hidden), jnp.float32)
    w2 = jax.random.normal(k2, (hidden, hidden), jnp.float32) * scale2
    b2 = jnp.zeros((1, hidden), jnp.float32)
    w3 = jax.random.normal(k3, (hidden, out_dim), jnp.float32) * scale2
    b3 = jnp.zeros((1, out_dim), jnp.float32)
    return (w1, b1, w2, b2, w3, b3)


if __name__ == "__main__":
    batch = 500            # deliberately not a multiple of the block size
    num_components = 32
    hidden = 64

    key = jax.random.PRNGKey(0)
    k_in, k_tt, k_gt = jax.random.split(key, 3)
    inputs = jax.random.normal(k_in, (batch, num_components), jnp.float32)
    # Tokens exist in the signature but are unused by the forward pass.
    type_token = jax.random.randint(k_tt, (batch, num_components), 0, 4)
    global_token = jax.random.randint(k_gt, (batch,), 0, 4)

    params = make_params(num_components, hidden)
    w1, b1, w2, b2, w3, b3 = params

    # f32 path (exercises a 4-step batch grid + boundary padding).
    out = amplitude_dsi_forward(inputs, type_token, global_token, params,
                                block_batch=128)
    out = jax.block_until_ready(out)

    # Reference check in plain JAX (same math, same params).
    ref = jnp.maximum(inputs @ w1 + b1, 0.0)
    ref = jnp.maximum(ref @ w2 + b2, 0.0)
    ref = ref @ w3 + b3
    assert out.shape == (batch, 1)
    assert jnp.allclose(out, ref, atol=1e-4, rtol=1e-4), float(
        jnp.max(jnp.abs(out - ref)))

    # bf16 operand path (v6e/v7x fast path) -- loose-tolerance smoke check.
    out_bf16 = jax.block_until_ready(
        amplitude_dsi_forward(inputs, type_token, global_token, params,
                              block_batch=128, use_bf16=True))
    assert out_bf16.shape == (batch, 1)
    assert jnp.allclose(out_bf16, ref, atol=1e-1, rtol=1e-1)

    print("KERNEL_OK")
</pallas_src>

<mosaic_0001>
module attributes {stable_mosaic.version = 11 : i64} {
  func.func @_mlp_kernel(%arg0: i32, %arg1: memref<128x32xf32, #tpu.memory_space<vmem>>, %arg2: memref<32x64xf32, #tpu.memory_space<vmem>>, %arg3: memref<1x64xf32, #tpu.memory_space<vmem>>, %arg4: memref<64x64xf32, #tpu.memory_space<vmem>>, %arg5: memref<1x64xf32, #tpu.memory_space<vmem>>, %arg6: memref<1x64xf32, #tpu.memory_space<vmem>>, %arg7: memref<1x1xf32, #tpu.memory_space<vmem>>, %arg8: memref<128x1xf32, #tpu.memory_space<vmem>>) attributes {dimension_semantics = [#tpu.dimension_semantics<parallel>], iteration_bounds = array<i64: 4>, scalar_prefetch = 0 : i64, scratch_operands = 0 : i64, tpu.core_type = #tpu.core_type<tc>, window_params = [{transform_indices = @transform_0, window_bounds = array<i64: 128, 32>}, {pipeline_mode = #tpu.pipeline_mode<synchronous>, transform_indices = @transform_1, window_bounds = array<i64: 32, 64>}, {pipeline_mode = #tpu.pipeline_mode<synchronous>, transform_indices = @transform_2, window_bounds = array<i64: 1, 64>}, {pipeline_mode = #tpu.pipeline_mode<synchronous>, transform_indices = @transform_3, window_bounds = array<i64: 64, 64>}, {pipeline_mode = #tpu.pipeline_mode<synchronous>, transform_indices = @transform_4, window_bounds = array<i64: 1, 64>}, {pipeline_mode = #tpu.pipeline_mode<synchronous>, transform_indices = @transform_5, window_bounds = array<i64: 1, 64>}, {pipeline_mode = #tpu.pipeline_mode<synchronous>, transform_indices = @transform_6, window_bounds = array<i64: 1, 1>}, {transform_indices = @transform_7, window_bounds = array<i64: 128, 1>}]} {
    %c0 = arith.constant 0 : index
    %c0_0 = arith.constant 0 : index
    %0 = vector.load %arg1[%c0, %c0_0] : memref<128x32xf32, #tpu.memory_space<vmem>>, vector<128x32xf32>
    %c0_1 = arith.constant 0 : index
    %c0_2 = arith.constant 0 : index
    %1 = vector.load %arg2[%c0_1, %c0_2] : memref<32x64xf32, #tpu.memory_space<vmem>>, vector<32x64xf32>
    %cst = arith.constant dense<0.000000e+00> : vector<128x64xf32>
    %2 = tpu.matmul %0, %1, %cst {dimension_numbers = #tpu.dot_dimension_numbers<[1], [0], [0], [1], [0, 0, 1, 1], [], []>} : vector<128x32xf32>, vector<32x64xf32>, vector<128x64xf32> -> vector<128x64xf32>
    %c0_3 = arith.constant 0 : index
    %c0_4 = arith.constant 0 : index
    %3 = vector.load %arg3[%c0_3, %c0_4] : memref<1x64xf32, #tpu.memory_space<vmem>>, vector<1x64xf32>
    %4 = vector.broadcast %3 : vector<1x64xf32> to vector<128x64xf32>
    %5 = arith.addf %2, %4 : vector<128x64xf32>
    %cst_5 = arith.constant 0.000000e+00 : f32
    %6 = vector.broadcast %cst_5 : f32 to vector<128x64xf32>
    %7 = arith.maximumf %5, %6 : vector<128x64xf32>
    %c0_6 = arith.constant 0 : index
    %c0_7 = arith.constant 0 : index
    %8 = vector.load %arg4[%c0_6, %c0_7] : memref<64x64xf32, #tpu.memory_space<vmem>>, vector<64x64xf32>
    %cst_8 = arith.constant dense<0.000000e+00> : vector<128x64xf32>
    %9 = tpu.matmul %7, %8, %cst_8 {dimension_numbers = #tpu.dot_dimension_numbers<[1], [0], [0], [1], [0, 0, 1, 1], [], []>} : vector<128x64xf32>, vector<64x64xf32>, vector<128x64xf32> -> vector<128x64xf32>
    %c0_9 = arith.constant 0 : index
    %c0_10 = arith.constant 0 : index
    %10 = vector.load %arg5[%c0_9, %c0_10] : memref<1x64xf32, #tpu.memory_space<vmem>>, vector<1x64xf32>
    %11 = vector.broadcast %10 : vector<1x64xf32> to vector<128x64xf32>
    %12 = arith.addf %9, %11 : vector<128x64xf32>
    %cst_11 = arith.constant 0.000000e+00 : f32
    %13 = vector.broadcast %cst_11 : f32 to vector<128x64xf32>
    %14 = arith.maximumf %12, %13 : vector<128x64xf32>
    %c0_12 = arith.constant 0 : index
    %c0_13 = arith.constant 0 : index
    %15 = vector.load %arg6[%c0_12, %c0_13] : memref<1x64xf32, #tpu.memory_space<vmem>>, vector<1x64xf32>
    %16 = vector.broadcast %15 : vector<1x64xf32> to vector<128x64xf32>
    %17 = arith.mulf %14, %16 : vector<128x64xf32>
    %cst_14 = arith.constant dense<0.000000e+00> : vector<128xf32>
    %18 = vector.multi_reduction <add>, %17, %cst_14 [1] : vector<128x64xf32> to vector<128xf32>
    %19 = vector.shape_cast %18 : vector<128xf32> to vector<128x1xf32>
    %c0_15 = arith.constant 0 : index
    %c0_16 = arith.constant 0 : index
    %20 = vector.load %arg7[%c0_15, %c0_16] : memref<1x1xf32, #tpu.memory_space<vmem>>, vector<1x1xf32>
    %21 = vector.broadcast %20 : vector<1x1xf32> to vector<128x1xf32>
    %22 = arith.addf %19, %21 : vector<128x1xf32>
    %c0_17 = arith.constant 0 : index
    %c0_18 = arith.constant 0 : index
    %23 = vector.load %arg8[%c0_17, %c0_18] : memref<128x1xf32, #tpu.memory_space<vmem>>, vector<128x1xf32>
    tpu.vector_store %arg8[%c0_17, %c0_18], %22 {strides = array<i32>} : memref<128x1xf32, #tpu.memory_space<vmem>>, vector<128x1xf32>,
    return
  }
  func.func @transform_0(%arg0: i32) -> (i32, i32) {
    %c0_i32 = arith.constant 0 : i32
    %c0_i32_0 = arith.constant 0 : i32
    return %arg0, %c0_i32 : i32, i32
  }
  func.func @transform_1(%arg0: i32) -> (i32, i32) {
    %c0_i32 = arith.constant 0 : i32
    %c0_i32_0 = arith.constant 0 : i32
    %c0_i32_1 = arith.constant 0 : i32
    return %c0_i32, %c0_i32_0 : i32, i32
  }
  func.func @transform_2(%arg0: i32) -> (i32, i32) {
    %c0_i32 = arith.constant 0 : i32
    %c0_i32_0 = arith.constant 0 : i32
    %c0_i32_1 = arith.constant 0 : i32
    return %c0_i32, %c0_i32_0 : i32, i32
  }
  func.func @transform_3(%arg0: i32) -> (i32, i32) {
    %c0_i32 = arith.constant 0 : i32
    %c0_i32_0 = arith.constant 0 : i32
    %c0_i32_1 = arith.constant 0 : i32
    return %c0_i32, %c0_i32_0 : i32, i32
  }
  func.func @transform_4(%arg0: i32) -> (i32, i32) {
    %c0_i32 = arith.constant 0 : i32
    %c0_i32_0 = arith.constant 0 : i32
    %c0_i32_1 = arith.constant 0 : i32
    return %c0_i32, %c0_i32_0 : i32, i32
  }
  func.func @transform_5(%arg0: i32) -> (i32, i32) {
    %c0_i32 = arith.constant 0 : i32
    %c0_i32_0 = arith.constant 0 : i32
    %c0_i32_1 = arith.constant 0 : i32
    return %c0_i32, %c0_i32_0 : i32, i32
  }
  func.func @transform_6(%arg0: i32) -> (i32, i32) {
    %c0_i32 = arith.constant 0 : i32
    %c0_i32_0 = arith.constant 0 : i32
    %c0_i32_1 = arith.constant 0 : i32
    return %c0_i32, %c0_i32_0 : i32, i32
  }
  func.func @transform_7(%arg0: i32) -> (i32, i32) {
    %c0_i32 = arith.constant 0 : i32
    %c0_i32_0 = arith.constant 0 : i32
    return %arg0, %c0_i32 : i32, i32
  }
}

</mosaic_0001>

<llo_original>
// kernel: tpu_custom_call.1
$region0: #{tpu_custom_call.1}
  #allocation0 [shape = 'u32[]', space=smem, size = 0x4, offset = 0x4, fixed_abs, tag = 'smem constant byte address 0x4 - core index']
  #allocation1 [shape = 'u32[144,128]{1,0:T(1,128)}', space=vmem, size = 0x12000, scoped, tag = 'internal scratch']
  #allocation2 [shape = 'f32[1,1]{1,0:T(1,128)S(1)}', space=vmem, size = 0x200, scoped, tag = 'scoped memory for tpu_custom_call.1']
  %s0 = inlined_call_operand.vmem [shape: f32[512,32], index: 0, kind: input, shape index: {}]
  %s1 = inlined_call_operand.vmem [shape: f32[32,64], index: 1, kind: input, shape index: {}]
  %s2 = inlined_call_operand.vmem [shape: f32[1,64], index: 2, kind: input, shape index: {}]
  %s3 = inlined_call_operand.vmem [shape: f32[64,64], index: 3, kind: input, shape index: {}]
  %s4 = inlined_call_operand.vmem [shape: f32[1,64], index: 4, kind: input, shape index: {}]
  %s5 = inlined_call_operand.vmem [shape: f32[1,64], index: 5, kind: input, shape index: {}]
  %s6 = inlined_call_operand.<no memory space> [shape: f32[1,1], index: 6, kind: input, shape index: {}]
  %s7 = inlined_call_operand.vmem [shape: f32[512,1], index: 7, kind: output, shape index: {}]
  %s8 = sld [smem:[#allocation0]]
  $region61: #{tpu_custom_call.1} parent=0
    _
  %s10 = ssub.s32 1, %s8
  %s11 = scalar_select 0, %s10, %s8
  %v12 = vstv %s6
  %13 = vst [vmem:[#allocation2] sm:$0x1] %v12
  loop: start=0, step=1, limit=6
  $region2: #{tpu_custom_call.1} parent=0 // loop_pre_header
    _
  $region3: #{tpu_custom_call.1} parent=0 // loop_header
    %s15 = sphi 0, %s19
    %p16 = scmp.ge.s32.totalorder %s15, 6
    %s25 = sphi 0, %s27
    %s28 = sphi 0, %s25
    %s29 = sphi 0, %s28
    %s45 = sphi 0, %s29
    %s49 = sphi 0, %s49
    %s51 = sphi 0, %s49
    %s52 = sphi 0, %s51
    %s66 = sphi 0, %s52
    %s70 = sphi 0, %s70
    %s72 = sphi 0, %s70
    %s73 = sphi 0, %s72
    %s87 = sphi 0, %s73
    %s91 = sphi 0, %s91
    %s93 = sphi 0, %s91
    %s94 = sphi 0, %s93
    %s108 = sphi 0, %s94
    %s112 = sphi 0, %s112
    %s114 = sphi 0, %s112
    %s115 = sphi 0, %s114
    %s129 = sphi 0, %s115
    %s133 = sphi 0, %s133
    %s135 = sphi 0, %s133
    %s136 = sphi 0, %s135
    %s150 = sphi 0, %s136
    %s154 = sphi 0, %s154
    %s156 = sphi 0, %s154
    %s157 = sphi 0, %s156
    %s171 = sphi 0, %s157
    %s177 = sphi 0, %s179
    %s180 = sphi 0, %s177
    %s181 = sphi 0, %s180
    %s197 = sphi 0, %s181
  $region4: #{tpu_custom_call.1} parent=0 // loop_header_branch
    %18 = sbr.rel (%p16) target = $region8
  $region5: #{tpu_custom_call.1} parent=0 // loop_body
    %s20 = ssub.s32 %s15, 1
    %s21 = ssub.s32 %s15, 2
    %s22 = sadd.s32 %s15, 1
    %s23 = ssub.s32 %s15, %s22
    %p24 = scmp.eq.s32.totalorder %s23, 0
    %s26 = sadd.s32 %s25, 1
    %s27 = scalar_select %p24, %s25, %s26
    %p30 = pneg %p24
    %p31 = scmp.eq.s32.totalorder %s15, 3
    %p32 = por %p30, %p31
    %p33 = scmp.ne.s32.totalorder %s25, %s28
    %p34 = scmp.eq.s32.totalorder %s15, 0
    %p35 = por %p33, %p34
    %p36 = scmp.ne.s32.totalorder %s25, %s28
    %p37 = scmp.eq.s32.totalorder %s20, 3
    %p38 = por %p36, %p37
    %p39 = scmp.ne.s32.totalorder %s28, %s29
    %p40 = scmp.eq.s32.totalorder %s20, 0
    %p41 = por %p39, %p40
    %p42 = scmp.ne.s32.totalorder %s28, %s29
    %p43 = scmp.eq.s32.totalorder %s21, 3
    %p44 = por %p42, %p43
    %p46 = scmp.ne.s32.totalorder %s29, %s45
    %p47 = scmp.eq.s32.totalorder %s21, 0
    %p48 = por %p46, %p47
    %s50 = sadd.s32 %s49, 1
    %p53 = scmp.eq.s32.totalorder %s15, 3
    %p54 = scmp.ne.s32.totalorder %s49, %s51
    %p55 = scmp.eq.s32.totalorder %s15, 0
    %p56 = por %p54, %p55
    %p57 = scmp.ne.s32.totalorder %s49, %s51
    %p58 = scmp.eq.s32.totalorder %s20, 3
    %p59 = por %p57, %p58
    %p60 = scmp.ne.s32.totalorder %s51, %s52
    %p61 = scmp.eq.s32.totalorder %s20, 0
    %p62 = por %p60, %p61
    %p63 = scmp.ne.s32.totalorder %s51, %s52
    %p64 = scmp.eq.s32.totalorder %s21, 3
    %p65 = por %p63, %p64
    %p67 = scmp.ne.s32.totalorder %s52, %s66
    %p68 = scmp.eq.s32.totalorder %s21, 0
    %p69 = por %p67, %p68
    %s71 = sadd.s32 %s70, 1
    %p74 = scmp.eq.s32.totalorder %s15, 3
    %p75 = scmp.ne.s32.totalorder %s70, %s72
    %p76 = scmp.eq.s32.totalorder %s15, 0
    %p77 = por %p75, %p76
    %p78 = scmp.ne.s32.totalorder %s70, %s72
    %p79 = scmp.eq.s32.totalorder %s20, 3
    %p80 = por %p78, %p79
    %p81 = scmp.ne.s32.totalorder %s72, %s73
    %p82 = scmp.eq.s32.totalorder %s20, 0
    %p83 = por %p81, %p82
    %p84 = scmp.ne.s32.totalorder %s72, %s73
    %p85 = scmp.eq.s32.totalorder %s21, 3
    %p86 = por %p84, %p85
    %p88 = scmp.ne.s32.totalorder %s73, %s87
    %p89 = scmp.eq.s32.totalorder %s21, 0
    %p90 = por %p88, %p89
    %s92 = sadd.s32 %s91, 1
    %p95 = scmp.eq.s32.totalorder %s15, 3
    %p96 = scmp.ne.s32.totalorder %s91, %s93
    %p97 = scmp.eq.s32.totalorder %s15, 0
    %p98 = por %p96, %p97
    %p99 = scmp.ne.s32.totalorder %s91, %s93
    %p100 = scmp.eq.s32.totalorder %s20, 3
    %p101 = por %p99, %p100
    %p102 = scmp.ne.s32.totalorder %s93, %s94
    %p103 = scmp.eq.s32.totalorder %s20, 0
    %p104 = por %p102, %p103
    %p105 = scmp.ne.s32.totalorder %s93, %s94
    %p106 = scmp.eq.s32.totalorder %s21, 3
    %p107 = por %p105, %p106
    %p109 = scmp.ne.s32.totalorder %s94, %s108
    %p110 = scmp.eq.s32.totalorder %s21, 0
    %p111 = por %p109, %p110
    %s113 = sadd.s32 %s112, 1
    %p116 = scmp.eq.s32.totalorder %s15, 3
    %p117 = scmp.ne.s32.totalorder %s112, %s114
    %p118 = scmp.eq.s32.totalorder %s15, 0
    %p119 = por %p117, %p118
    %p120 = scmp.ne.s32.totalorder %s112, %s114
    %p121 = scmp.eq.s32.totalorder %s20, 3
    %p122 = por %p120, %p121
    %p123 = scmp.ne.s32.totalorder %s114, %s115
    %p124 = scmp.eq.s32.totalorder %s20, 0
    %p125 = por %p123, %p124
    %p126 = scmp.ne.s32.totalorder %s114, %s115
    %p127 = scmp.eq.s32.totalorder %s21, 3
    %p128 = por %p126, %p127
    %p130 = scmp.ne.s32.totalorder %s115, %s129
    %p131 = scmp.eq.s32.totalorder %s21, 0
    %p132 = por %p130, %p131
    %s134 = sadd.s32 %s133, 1
    %p137 = scmp.eq.s32.totalorder %s15, 3
    %p138 = scmp.ne.s32.totalorder %s133, %s135
    %p139 = scmp.eq.s32.totalorder %s15, 0
    %p140 = por %p138, %p139
    %p141 = scmp.ne.s32.totalorder %s133, %s135
    %p142 = scmp.eq.s32.totalorder %s20, 3
    %p143 = por %p141, %p142
    %p144 = scmp.ne.s32.totalorder %s135, %s136
    %p145 = scmp.eq.s32.totalorder %s20, 0
    %p146 = por %p144, %p145
    %p147 = scmp.ne.s32.totalorder %s135, %s136
    %p148 = scmp.eq.s32.totalorder %s21, 3
    %p149 = por %p147, %p148
    %p151 = scmp.ne.s32.totalorder %s136, %s150
    %p152 = scmp.eq.s32.totalorder %s21, 0
    %p153 = por %p151, %p152
    %s155 = sadd.s32 %s154, 1
    %p158 = scmp.eq.s32.totalorder %s15, 3
    %p159 = scmp.ne.s32.totalorder %s154, %s156
    %p160 = scmp.eq.s32.totalorder %s15, 0
    %p161 = por %p159, %p160
    %p162 = scmp.ne.s32.totalorder %s154, %s156
    %p163 = scmp.eq.s32.totalorder %s20, 3
    %p164 = por %p162, %p163
    %p165 = scmp.ne.s32.totalorder %s156, %s157
    %p166 = scmp.eq.s32.totalorder %s20, 0
    %p167 = por %p165, %p166
    %p168 = scmp.ne.s32.totalorder %s156, %s157
    %p169 = scmp.eq.s32.totalorder %s21, 3
    %p170 = por %p168, %p169
    %p172 = scmp.ne.s32.totalorder %s157, %s171
    %p173 = scmp.eq.s32.totalorder %s21, 0
    %p174 = por %p172, %p173
    %s175 = ssub.s32 %s15, %s22
    %p176 = scmp.eq.s32.totalorder %s175, 0
    %s178 = sadd.s32 %s177, 1
    %s179 = scalar_select %p176, %s177, %s178
    %p182 = pneg %p176
    %p183 = scmp.eq.s32.totalorder %s15, 3
    %p184 = por %p182, %p183
    %p185 = scmp.ne.s32.totalorder %s177, %s180
    %p186 = scmp.eq.s32.totalorder %s15, 0
    %p187 = por %p185, %p186
    %p188 = scmp.ne.s32.totalorder %s177, %s180
    %p189 = scmp.eq.s32.totalorder %s20, 3
    %p190 = por %p188, %p189
    %p191 = scmp.ne.s32.totalorder %s180, %s181
    %p192 = scmp.eq.s32.totalorder %s20, 0
    %p193 = por %p191, %p192
    %p194 = scmp.ne.s32.totalorder %s180, %s181
    %p195 = scmp.eq.s32.totalorder %s21, 3
    %p196 = por %p194, %p195
    %p198 = scmp.ne.s32.totalorder %s181, %s197
    %p199 = scmp.eq.s32.totalorder %s21, 0
    %p200 = por %p198, %p199
    %p201 = scmp.le.s32.totalorder 1, %s15
    %p202 = scmp.lt.s32.totalorder %s15, 5
    %p203 = pnand %p201, %p202
    %p204 = pneg %p203
    // Predicated region
    $region9: #{tpu_custom_call.1} parent=5 // pred_check
      _
    $region10: #{tpu_custom_call.1} parent=5 // pred_check_branch
      %206 = sbr.rel (%p203) target = $region12
    $region11: #{tpu_custom_call.1} parent=5 // pred_region
      %s207 = ssub.s32 %s15, 1
      // Predicated region
      $region13: #{tpu_custom_call.1} parent=11 // pred_check
        %p208 = pneg %p62
      $region14: #{tpu_custom_call.1} parent=11 // pred_check_branch
        %210 = sbr.rel (%p208) target = $region16
      $region15: #{tpu_custom_call.1} parent=11 // pred_region
        _
      $region16: #{tpu_custom_call.1} parent=11 // pred_fallthru
        _
      // Predicated region
      $region17: #{tpu_custom_call.1} parent=11 // pred_check
        %p211 = pneg %p83
      $region18: #{tpu_custom_call.1} parent=11 // pred_check_branch
        %213 = sbr.rel (%p211) target = $region20
      $region19: #{tpu_custom_call.1} parent=11 // pred_region
        _
      $region20: #{tpu_custom_call.1} parent=11 // pred_fallthru
        _
      // Predicated region
      $region21: #{tpu_custom_call.1} parent=11 // pred_check
        %p214 = pneg %p104
      $region22: #{tpu_custom_call.1} parent=11 // pred_check_branch
        %216 = sbr.rel (%p214) target = $region24
      $region23: #{tpu_custom_call.1} parent=11 // pred_region
        _
      $region24: #{tpu_custom_call.1} parent=11 // pred_fallthru
        _
      // Predicated region
      $region25: #{tpu_custom_call.1} parent=11 // pred_check
        %p217 = pneg %p125
      $region26: #{tpu_custom_call.1} parent=11 // pred_check_branch
        %219 = sbr.rel (%p217) target = $region28
      $region27: #{tpu_custom_call.1} parent=11 // pred_region
        _
      $region28: #{tpu_custom_call.1} parent=11 // pred_fallthru
        _
      // Predicated region
      $region29: #{tpu_custom_call.1} parent=11 // pred_check
        %p220 = pneg %p146
      $region30: #{tpu_custom_call.1} parent=11 // pred_check_branch
        %222 = sbr.rel (%p220) target = $region32
      $region31: #{tpu_custom_call.1} parent=11 // pred_region
        _
      $region32: #{tpu_custom_call.1} parent=11 // pred_fallthru
        _
      // Predicated region
      $region33: #{tpu_custom_call.1} parent=11 // pred_check
        %p223 = pneg %p167
      $region34: #{tpu_custom_call.1} parent=11 // pred_check_branch
        %225 = sbr.rel (%p223) target = $region36
      $region35: #{tpu_custom_call.1} parent=11 // pred_region
        _
      $region36: #{tpu_custom_call.1} parent=11 // pred_fallthru
        _
    $region12: #{tpu_custom_call.1} parent=5 // pred_fallthru
      _
    %p226 = scmp.lt.s32.totalorder %s15, 4
    // Predicated region
    $region37: #{tpu_custom_call.1} parent=5 // pred_check
      %p227 = pneg %p226
    $region38: #{tpu_custom_call.1} parent=5 // pred_check_branch
      %229 = sbr.rel (%p227) target = $region40
    $region39: #{tpu_custom_call.1} parent=5 // pred_region
      // Predicated region
      $region41: #{tpu_custom_call.1} parent=39 // pred_check
        %p230 = pneg %p35
      $region42: #{tpu_custom_call.1} parent=39 // pred_check_branch
        %232 = sbr.rel (%p230) target = $region44
      $region43: #{tpu_custom_call.1} parent=39 // pred_region
        %s233 = smul.u32 16, %s15
        %p234 = scmp.lt.s32.totalorder %s233, 63
        %s235 = scalar_select %p234, %s233, 63
        %s236 = smul.addr %s235, 8
        %s237 = scalar_lea.vmem %s0, %s236
        %s238 = smul.u32 16, %s15
      $region44: #{tpu_custom_call.1} parent=39 // pred_fallthru
        _
    $region40: #{tpu_custom_call.1} parent=5 // pred_fallthru
      _
    %p239 = scmp.le.s32.totalorder 1, %s15
    %p240 = scmp.lt.s32.totalorder %s15, 5
    %p241 = pnand %p239, %p240
    %p242 = pneg %p241
    // Predicated region
    $region45: #{tpu_custom_call.1} parent=5 // pred_check
      _
    $region46: #{tpu_custom_call.1} parent=5 // pred_check_branch
      %244 = sbr.rel (%p241) target = $region48
    $region47: #{tpu_custom_call.1} parent=5 // pred_region
      %s245 = ssub.s32 %s15, 1
      %s246 = smul.u32 16, %s20
      %p247 = scmp.lt.s32.totalorder %s246, 63
      %s248 = scalar_select %p247, %s246, 63
      %s249 = smul.addr %s248, 8
      %s250 = scalar_lea.vmem %s0, %s249
      %p251 = pneg %p41
      %p252 = pneg %p38
      %p253 = pneg %p62
      %p254 = pneg %p59
      %p255 = pneg %p83
      %p256 = pneg %p80
      %p257 = pneg %p104
      %p258 = pneg %p101
      %p259 = pneg %p125
      %p260 = pneg %p122
      %p261 = pneg %p146
      %p262 = pneg %p143
      %p263 = pneg %p167
      %p264 = pneg %p164
      %p265 = pneg %p193
      %p266 = pneg %p190
      %s267 = smul.u32 16, %s20
      %p268 = scmp.lt.s32.totalorder %s267, 63
      %s269 = scalar_select %p268, %s267, 63
      %s270 = smul.addr %s269, 8
      %s271 = scalar_lea.vmem %s7, %s270
      %s272 = smul.u32 16, %s20
      %p273 = scmp.lt.s32.totalorder %s272, 63
      %s274 = scalar_select %p273, %s272, 63
      %s275 = smul.addr %s274, 8
      %s276 = scalar_lea.vmem %s0, %s275
      %s277 = smul.u32 16, %s20
      %s278 = smul.u32 16, %s20
      %p279 = scmp.lt.s32.totalorder %s278, 63
      %s280 = scalar_select %p279, %s278, 63
      %s281 = smul.addr %s280, 8
      %s282 = scalar_lea.vmem %s7, %s281
      %s283 = smul.u32 16, %s20
      %v284 = vld [vmem:[%s276] sm:$0xff]
      %v285 = vld [vmem:[%s276 + $0x8] sm:$0xff]
      %v286 = vld [vmem:[%s276 + $0x10] sm:$0xff]
      %v287 = vld [vmem:[%s276 + $0x18] sm:$0xff]
      %v288 = vld [vmem:[%s276 + $0x20] sm:$0xff]
      %v289 = vld [vmem:[%s276 + $0x28] sm:$0xff]
      %v290 = vld [vmem:[%s276 + $0x30] sm:$0xff]
      %v291 = vld [vmem:[%s276 + $0x38] sm:$0xff]
      %v292 = vld [vmem:[%s276 + $0x40] sm:$0xff]
      %v293 = vld [vmem:[%s276 + $0x48] sm:$0xff]
      %v294 = vld [vmem:[%s276 + $0x50] sm:$0xff]
      %v295 = vld [vmem:[%s276 + $0x58] sm:$0xff]
      %v296 = vld [vmem:[%s276 + $0x60] sm:$0xff]
      %v297 = vld [vmem:[%s276 + $0x68] sm:$0xff]
      %v298 = vld [vmem:[%s276 + $0x70] sm:$0xff]
      %v299 = vld [vmem:[%s276 + $0x78] sm:$0xff]
      %v300 = vld [vmem:[%s1] sm:$0xff]
      %v301 = vld [vmem:[%s1 + $0x8] sm:$0xff]
      %v302 = vld [vmem:[%s1 + $0x10] sm:$0xff]
      %v303 = vld [vmem:[%s1 + $0x18] sm:$0xff]
      %v304 = vld [vmem:[%s2] sm:$0x1]
      %v306 = vlaneseq
      %v307 = vshrl.u32 %v306, 7
      %v308 = vsub.s32 0, %v307
      %v309 = vrot.slane %v304, %v308
      %vm311 = vcmask 261120
      %v313 = vsel %vm311, %v284, 0
      %v316 = vsel %vm311, %v285, 0
      %v319 = vsel %vm311, %v286, 0
      %v322 = vsel %vm311, %v287, 0
      %v325 = vsel %vm311, %v288, 0
      %v328 = vsel %vm311, %v289, 0
      %v331 = vsel %vm311, %v290, 0
      %v334 = vsel %vm311, %v291, 0
      %v337 = vsel %vm311, %v292, 0
      %v340 = vsel %vm311, %v293, 0
      %v343 = vsel %vm311, %v294, 0
      %v346 = vsel %vm311, %v295, 0
      %v349 = vsel %vm311, %v296, 0
      %v352 = vsel %vm311, %v297, 0
      %v355 = vsel %vm311, %v298, 0
      %v358 = vsel %vm311, %v299, 0
      %360 = vmatprep.subr.mxu0 0.0
      %361 = vmatpush1.msra.mxu0 0.0
      %362 = vmatprep.subr.mxu0 0.0
      %363 = vmatpush1.msra.mxu0 0.0
      %364 = vmatprep.subr.mxu0 0.0
      %365 = vmatpush1.msra.mxu0 0.0
      %366 = vmatprep.subr.mxu0 0.0
      %367 = vmatpush1.msra.mxu0 0.0
      %368 = vmatprep.subr.mxu0 0.0
      %369 = vmatpush1.msra.mxu0 0.0
      %370 = vmatprep.subr.mxu0 0.0
      %371 = vmatpush1.msra.mxu0 0.0
      %372 = vmatprep.subr.mxu0 0.0
      %373 = vmatpush1.msra.mxu0 0.0
      %374 = vmatprep.subr.mxu0 0.0
      %375 = vmatpush1.msra.mxu0 0.0
      %376 = vmatprep.subr.mxu0 0.0
      %377 = vmatpush1.msra.mxu0 0.0
      %378 = vmatprep.subr.mxu0 0.0
      %379 = vmatpush1.msra.mxu0 0.0
      %380 = vmatprep.subr.mxu0 0.0
      %381 = vmatpush1.msra.mxu0 0.0
      %382 = vmatprep.subr.mxu0 0.0
      %383 = vmatpush1.msra.mxu0 0.0
      %384 = vmatprep.subr.mxu0 0.0
      %385 = vmatpush1.msra.mxu0 %v303
      %386 = vmatprep.subr.mxu0 0.0
      %387 = vmatpush1.msra.mxu0 %v302
      %388 = vmatprep.subr.mxu0 0.0
      %389 = vmatpush1.msra.mxu0 %v301
      %390 = vmatprep.subr.mxu0 0.0
      %391 = vmatpush1.msra.mxu0 %v300
      %392 = vmatprep.subr.mxu0 0.0
      %393 = vmatpush2.msra.mxu0 0.0
      %394 = vmatprep.subr.mxu0 0.0
      %395 = vmatpush2.msra.mxu0 0.0
      %396 = vmatprep.subr.mxu0 0.0
      %397 = vmatpush2.msra.mxu0 0.0
      %398 = vmatprep.subr.mxu0 0.0
      %399 = vmatpush2.msra.mxu0 0.0
      %400 = vmatprep.subr.mxu0 0.0
      %401 = vmatpush2.msra.mxu0 0.0
      %402 = vmatprep.subr.mxu0 0.0
      %403 = vmatpush2.msra.mxu0 0.0
      %404 = vmatprep.subr.mxu0 0.0
      %405 = vmatpush2.msra.mxu0 0.0
      %406 = vmatprep.subr.mxu0 0.0
      %407 = vmatpush2.msra.mxu0 0.0
      %408 = vmatprep.subr.mxu0 0.0
      %409 = vmatpush2.msra.mxu0 0.0
      %410 = vmatprep.subr.mxu0 0.0
      %411 = vmatpush2.msra.mxu0 0.0
      %412 = vmatprep.subr.mxu0 0.0
      %413 = vmatpush2.msra.mxu0 0.0
      %414 = vmatprep.subr.mxu0 0.0
      %415 = vmatpush2.msra.mxu0 0.0
      %416 = vmatprep.subr.mxu0 0.0
      %417 = vmatpush2.msra.mxu0 0.0
      %418 = vmatprep.subr.mxu0 0.0
      %419 = vmatpush2.msra.mxu0 0.0
      %420 = vmatprep.subr.mxu0 0.0
      %421 = vmatpush2.msra.mxu0 0.0
      %422 = vmatprep.subr.mxu0 0.0
      %423 = vmatpush2.msra.mxu0 0.0
      %424 = vmatprep.mubr.f32.mxu0 0.0
      %425 = vmatmul.mubr.f32.gmra.mxu0 %v313
      %v426 = vpop.f32.mrf.mxu0
      %v427 = vadd.f32 %v309, %v426
      %v428 = vpop.f32.mrf.mxu0
      %429 = vmatprep.mubr.f32.mxu0 0.0
      %430 = vmatmul.mubr.f32.gmra.mxu0 %v316
      %v431 = vpop.f32.mrf.mxu0
      %v432 = vadd.f32 %v309, %v431
      %v433 = vpop.f32.mrf.mxu0
      %434 = vmatprep.mubr.f32.mxu0 0.0
      %435 = vmatmul.mubr.f32.gmra.mxu0 %v319
      %v436 = vpop.f32.mrf.mxu0
      %v437 = vadd.f32 %v309, %v436
      %v438 = vpop.f32.mrf.mxu0
      %439 = vmatprep.mubr.f32.mxu0 0.0
      %440 = vmatmul.mubr.f32.gmra.mxu0 %v322
      %v441 = vpop.f32.mrf.mxu0
      %v442 = vadd.f32 %v309, %v441
      %v443 = vpop.f32.mrf.mxu0
      %444 = vmatprep.mubr.f32.mxu0 0.0
      %445 = vmatmul.mubr.f32.gmra.mxu0 %v325
      %v446 = vpop.f32.mrf.mxu0
      %v447 = vadd.f32 %v309, %v446
      %v448 = vpop.f32.mrf.mxu0
      %449 = vmatprep.mubr.f32.mxu0 0.0
      %450 = vmatmul.mubr.f32.gmra.mxu0 %v328
      %v451 = vpop.f32.mrf.mxu0
      %v452 = vadd.f32 %v309, %v451
      %v453 = vpop.f32.mrf.mxu0
      %454 = vmatprep.mubr.f32.mxu0 0.0
      %455 = vmatmul.mubr.f32.gmra.mxu0 %v331
      %v456 = vpop.f32.mrf.mxu0
      %v457 = vadd.f32 %v309, %v456
      %v458 = vpop.f32.mrf.mxu0
      %459 = vmatprep.mubr.f32.mxu0 0.0
      %460 = vmatmul.mubr.f32.gmra.mxu0 %v334
      %v461 = vpop.f32.mrf.mxu0
      %v462 = vadd.f32 %v309, %v461
      %v463 = vpop.f32.mrf.mxu0
      %464 = vmatprep.mubr.f32.mxu0 0.0
      %465 = vmatmul.mubr.f32.gmra.mxu0 %v337
      %v466 = vpop.f32.mrf.mxu0
      %v467 = vadd.f32 %v309, %v466
      %v468 = vpop.f32.mrf.mxu0
      %469 = vmatprep.mubr.f32.mxu0 0.0
      %470 = vmatmul.mubr.f32.gmra.mxu0 %v340
      %v471 = vpop.f32.mrf.mxu0
      %v472 = vadd.f32 %v309, %v471
      %v473 = vpop.f32.mrf.mxu0
      %474 = vmatprep.mubr.f32.mxu0 0.0
      %475 = vmatmul.mubr.f32.gmra.mxu0 %v343
      %v476 = vpop.f32.mrf.mxu0
      %v477 = vadd.f32 %v309, %v476
      %v478 = vpop.f32.mrf.mxu0
      %479 = vmatprep.mubr.f32.mxu0 0.0
      %480 = vmatmul.mubr.f32.gmra.mxu0 %v346
      %v481 = vpop.f32.mrf.mxu0
      %v482 = vadd.f32 %v309, %v481
      %v483 = vpop.f32.mrf.mxu0
      %484 = vmatprep.mubr.f32.mxu0 0.0
      %485 = vmatmul.mubr.f32.gmra.mxu0 %v349
      %v486 = vpop.f32.mrf.mxu0
      %v487 = vadd.f32 %v309, %v486
      %v488 = vpop.f32.mrf.mxu0
      %489 = vmatprep.mubr.f32.mxu0 0.0
      %490 = vmatmul.mubr.f32.gmra.mxu0 %v352
      %v491 = vpop.f32.mrf.mxu0
      %v492 = vadd.f32 %v309, %v491
      %v493 = vpop.f32.mrf.mxu0
      %494 = vmatprep.mubr.f32.mxu0 0.0
      %495 = vmatmul.mubr.f32.gmra.mxu0 %v355
      %v496 = vpop.f32.mrf.mxu0
      %v497 = vadd.f32 %v309, %v496
      %v498 = vpop.f32.mrf.mxu0
      %499 = vmatprep.mubr.f32.mxu0 0.0
      %500 = vmatmul.mubr.f32.gmra.mxu0 %v358
      %v501 = vpop.f32.mrf.mxu0
      %v502 = vadd.f32 %v309, %v501
      %v503 = vpop.f32.mrf.mxu0
      %504 = vdwg.mxu0
      %v505 = vmax.f32 %v427, 0.0
      %v506 = vmax.f32 %v432, 0.0
      %v507 = vmax.f32 %v437, 0.0
      %v508 = vmax.f32 %v442, 0.0
      %v509 = vmax.f32 %v447, 0.0
      %v510 = vmax.f32 %v452, 0.0
      %v511 = vmax.f32 %v457, 0.0
      %v512 = vmax.f32 %v462, 0.0
      %v513 = vmax.f32 %v467, 0.0
      %v514 = vmax.f32 %v472, 0.0
      %v515 = vmax.f32 %v477, 0.0
      %v516 = vmax.f32 %v482, 0.0
      %v517 = vmax.f32 %v487, 0.0
      %v518 = vmax.f32 %v492, 0.0
      %v519 = vmax.f32 %v497, 0.0
      %v520 = vmax.f32 %v502, 0.0
      %v521 = vld [vmem:[%s3] sm:$0xff]
      %v522 = vld [vmem:[%s3 + $0x8] sm:$0xff]
      %v523 = vld [vmem:[%s3 + $0x10] sm:$0xff]
      %v524 = vld [vmem:[%s3 + $0x18] sm:$0xff]
      %v525 = vld [vmem:[%s3 + $0x20] sm:$0xff]
      %v526 = vld [vmem:[%s3 + $0x28] sm:$0xff]
      %v527 = vld [vmem:[%s3 + $0x30] sm:$0xff]
      %v528 = vld [vmem:[%s3 + $0x38] sm:$0xff]
      %v529 = vld [vmem:[%s4] sm:$0x1]
      %v531 = vlaneseq
      %v532 = vshrl.u32 %v531, 7
      %v533 = vsub.s32 0, %v532
      %v534 = vrot.slane %v529, %v533
      %vm536 = vcmask 523264
      %v538 = vsel %vm536, %v505, 0
      %v541 = vsel %vm536, %v506, 0
      %v544 = vsel %vm536, %v507, 0
      %v547 = vsel %vm536, %v508, 0
      %v550 = vsel %vm536, %v509, 0
      %v553 = vsel %vm536, %v510, 0
      %v556 = vsel %vm536, %v511, 0
      %v559 = vsel %vm536, %v512, 0
      %v562 = vsel %vm536, %v513, 0
      %v565 = vsel %vm536, %v514, 0
      %v568 = vsel %vm536, %v515, 0
      %v571 = vsel %vm536, %v516, 0
      %v574 = vsel %vm536, %v517, 0
      %v577 = vsel %vm536, %v518, 0
      %v580 = vsel %vm536, %v519, 0
      %v583 = vsel %vm536, %v520, 0
      %585 = vmatprep.subr.mxu0 0.0
      %586 = vmatpush1.msra.mxu0 0.0
      %587 = vmatprep.subr.mxu0 0.0
      %588 = vmatpush1.msra.mxu0 0.0
      %589 = vmatprep.subr.mxu0 0.0
      %590 = vmatpush1.msra.mxu0 0.0
      %591 = vmatprep.subr.mxu0 0.0
      %592 = vmatpush1.msra.mxu0 0.0
      %593 = vmatprep.subr.mxu0 0.0
      %594 = vmatpush1.msra.mxu0 0.0
      %595 = vmatprep.subr.mxu0 0.0
      %596 = vmatpush1.msra.mxu0 0.0
      %597 = vmatprep.subr.mxu0 0.0
      %598 = vmatpush1.msra.mxu0 0.0
      %599 = vmatprep.subr.mxu0 0.0
      %600 = vmatpush1.msra.mxu0 0.0
      %601 = vmatprep.subr.mxu0 0.0
      %602 = vmatpush1.msra.mxu0 %v528
      %603 = vmatprep.subr.mxu0 0.0
      %604 = vmatpush1.msra.mxu0 %v527
      %605 = vmatprep.subr.mxu0 0.0
      %606 = vmatpush1.msra.mxu0 %v526
      %607 = vmatprep.subr.mxu0 0.0
      %608 = vmatpush1.msra.mxu0 %v525
      %609 = vmatprep.subr.mxu0 0.0
      %610 = vmatpush1.msra.mxu0 %v524
      %611 = vmatprep.subr.mxu0 0.0
      %612 = vmatpush1.msra.mxu0 %v523
      %613 = vmatprep.subr.mxu0 0.0
      %614 = vmatpush1.msra.mxu0 %v522
      %615 = vmatprep.subr.mxu0 0.0
      %616 = vmatpush1.msra.mxu0 %v521
      %617 = vmatprep.subr.mxu0 0.0
      %618 = vmatpush2.msra.mxu0 0.0
      %619 = vmatprep.subr.mxu0 0.0
      %620 = vmatpush2.msra.mxu0 0.0
      %621 = vmatprep.subr.mxu0 0.0
      %622 = vmatpush2.msra.mxu0 0.0
      %623 = vmatprep.subr.mxu0 0.0
      %624 = vmatpush2.msra.mxu0 0.0
      %625 = vmatprep.subr.mxu0 0.0
      %626 = vmatpush2.msra.mxu0 0.0
      %627 = vmatprep.subr.mxu0 0.0
      %628 = vmatpush2.msra.mxu0 0.0
      %629 = vmatprep.subr.mxu0 0.0
      %630 = vmatpush2.msra.mxu0 0.0
      %631 = vmatprep.subr.mxu0 0.0
      %632 = vmatpush2.msra.mxu0 0.0
      %633 = vmatprep.subr.mxu0 0.0
      %634 = vmatpush2.msra.mxu0 0.0
      %635 = vmatprep.subr.mxu0 0.0
      %636 = vmatpush2.msra.mxu0 0.0
      %637 = vmatprep.subr.mxu0 0.0
      %638 = vmatpush2.msra.mxu0 0.0
      %639 = vmatprep.subr.mxu0 0.0
      %640 = vmatpush2.msra.mxu0 0.0
      %641 = vmatprep.subr.mxu0 0.0
      %642 = vmatpush2.msra.mxu0 0.0
      %643 = vmatprep.subr.mxu0 0.0
      %644 = vmatpush2.msra.mxu0 0.0
      %645 = vmatprep.subr.mxu0 0.0
      %646 = vmatpush2.msra.mxu0 0.0
      %647 = vmatprep.subr.mxu0 0.0
      %648 = vmatpush2.msra.mxu0 0.0
      %649 = vmatprep.mubr.f32.mxu0 0.0
      %650 = vmatmul.mubr.f32.gmra.mxu0 %v538
      %v651 = vpop.f32.mrf.mxu0
      %v652 = vadd.f32 %v534, %v651
      %v653 = vpop.f32.mrf.mxu0
      %654 = vmatprep.mubr.f32.mxu0 0.0
      %655 = vmatmul.mubr.f32.gmra.mxu0 %v541
      %v656 = vpop.f32.mrf.mxu0
      %v657 = vadd.f32 %v534, %v656
      %v658 = vpop.f32.mrf.mxu0
      %659 = vmatprep.mubr.f32.mxu0 0.0
      %660 = vmatmul.mubr.f32.gmra.mxu0 %v544
      %v661 = vpop.f32.mrf.mxu0
      %v662 = vadd.f32 %v534, %v661
      %v663 = vpop.f32.mrf.mxu0
      %664 = vmatprep.mubr.f32.mxu0 0.0
      %665 = vmatmul.mubr.f32.gmra.mxu0 %v547
      %v666 = vpop.f32.mrf.mxu0
      %v667 = vadd.f32 %v534, %v666
      %v668 = vpop.f32.mrf.mxu0
      %669 = vmatprep.mubr.f32.mxu0 0.0
      %670 = vmatmul.mubr.f32.gmra.mxu0 %v550
      %v671 = vpop.f32.mrf.mxu0
      %v672 = vadd.f32 %v534, %v671
      %v673 = vpop.f32.mrf.mxu0
      %674 = vmatprep.mubr.f32.mxu0 0.0
      %675 = vmatmul.mubr.f32.gmra.mxu0 %v553
      %v676 = vpop.f32.mrf.mxu0
      %v677 = vadd.f32 %v534, %v676
      %v678 = vpop.f32.mrf.mxu0
      %679 = vmatprep.mubr.f32.mxu0 0.0
      %680 = vmatmul.mubr.f32.gmra.mxu0 %v556
      %v681 = vpop.f32.mrf.mxu0
      %v682 = vadd.f32 %v534, %v681
      %v683 = vpop.f32.mrf.mxu0
      %684 = vmatprep.mubr.f32.mxu0 0.0
      %685 = vmatmul.mubr.f32.gmra.mxu0 %v559
      %v686 = vpop.f32.mrf.mxu0
      %v687 = vadd.f32 %v534, %v686
      %v688 = vpop.f32.mrf.mxu0
      %689 = vmatprep.mubr.f32.mxu0 0.0
      %690 = vmatmul.mubr.f32.gmra.mxu0 %v562
      %v691 = vpop.f32.mrf.mxu0
      %v692 = vadd.f32 %v534, %v691
      %v693 = vpop.f32.mrf.mxu0
      %694 = vmatprep.mubr.f32.mxu0 0.0
      %695 = vmatmul.mubr.f32.gmra.mxu0 %v565
      %v696 = vpop.f32.mrf.mxu0
      %v697 = vadd.f32 %v534, %v696
      %v698 = vpop.f32.mrf.mxu0
      %699 = vmatprep.mubr.f32.mxu0 0.0
      %700 = vmatmul.mubr.f32.gmra.mxu0 %v568
      %v701 = vpop.f32.mrf.mxu0
      %v702 = vadd.f32 %v534, %v701
      %v703 = vpop.f32.mrf.mxu0
      %704 = vmatprep.mubr.f32.mxu0 0.0
      %705 = vmatmul.mubr.f32.gmra.mxu0 %v571
      %v706 = vpop.f32.mrf.mxu0
      %v707 = vadd.f32 %v534, %v706
      %v708 = vpop.f32.mrf.mxu0
      %709 = vmatprep.mubr.f32.mxu0 0.0
      %710 = vmatmul.mubr.f32.gmra.mxu0 %v574
      %v711 = vpop.f32.mrf.mxu0
      %v712 = vadd.f32 %v534, %v711
      %v713 = vpop.f32.mrf.mxu0
      %714 = vmatprep.mubr.f32.mxu0 0.0
      %715 = vmatmul.mubr.f32.gmra.mxu0 %v577
      %v716 = vpop.f32.mrf.mxu0
      %v717 = vadd.f32 %v534, %v716
      %v718 = vpop.f32.mrf.mxu0
      %719 = vmatprep.mubr.f32.mxu0 0.0
      %720 = vmatmul.mubr.f32.gmra.mxu0 %v580
      %v721 = vpop.f32.mrf.mxu0
      %v722 = vadd.f32 %v534, %v721
      %v723 = vpop.f32.mrf.mxu0
      %724 = vmatprep.mubr.f32.mxu0 0.0
      %725 = vmatmul.mubr.f32.gmra.mxu0 %v583
      %v726 = vpop.f32.mrf.mxu0
      %v727 = vadd.f32 %v534, %v726
      %v728 = vpop.f32.mrf.mxu0
      %729 = vdwg.mxu0
      %v730 = vmax.f32 %v652, 0.0
      %v731 = vmax.f32 %v657, 0.0
      %v732 = vmax.f32 %v662, 0.0
      %v733 = vmax.f32 %v667, 0.0
      %v734 = vmax.f32 %v672, 0.0
      %v735 = vmax.f32 %v677, 0.0
      %v736 = vmax.f32 %v682, 0.0
      %v737 = vmax.f32 %v687, 0.0
      %v738 = vmax.f32 %v692, 0.0
      %v739 = vmax.f32 %v697, 0.0
      %v740 = vmax.f32 %v702, 0.0
      %v741 = vmax.f32 %v707, 0.0
      %v742 = vmax.f32 %v712, 0.0
      %v743 = vmax.f32 %v717, 0.0
      %v744 = vmax.f32 %v722, 0.0
      %v745 = vmax.f32 %v727, 0.0
      %v746 = vld [vmem:[%s5] sm:$0x1]
      %v748 = vlaneseq
      %v749 = vshrl.u32 %v748, 7
      %v750 = vsub.s32 0, %v749
      %v751 = vrot.slane %v746, %v750
      %v753 = vmul.f32 %v730, %v751
      %v754 = vmul.f32 %v731, %v751
      %v755 = vmul.f32 %v732, %v751
      %v756 = vmul.f32 %v733, %v751
      %v757 = vmul.f32 %v734, %v751
      %v758 = vmul.f32 %v735, %v751
      %v759 = vmul.f32 %v736, %v751
      %v760 = vmul.f32 %v737, %v751
      %v761 = vmul.f32 %v738, %v751
      %v762 = vmul.f32 %v739, %v751
      %v763 = vmul.f32 %v740, %v751
      %v764 = vmul.f32 %v741, %v751
      %v765 = vmul.f32 %v742, %v751
      %v766 = vmul.f32 %v743, %v751
      %v767 = vmul.f32 %v744, %v751
      %v768 = vmul.f32 %v745, %v751
      %v769 = vsel %vm536, %v753, 0.0
      %770 = vadd.xlane.f32.xlu0 %v769
      %v771 = vpop.xlane.xlu0 %770
      %v772 = vsel %vm536, %v754, 0.0
      %773 = vadd.xlane.f32.xlu0 %v772
      %v774 = vpop.xlane.xlu0 %773
      %v775 = vsel %vm536, %v755, 0.0
      %776 = vadd.xlane.f32.xlu0 %v775
      %v777 = vpop.xlane.xlu0 %776
      %v778 = vsel %vm536, %v756, 0.0
      %779 = vadd.xlane.f32.xlu0 %v778
      %v780 = vpop.xlane.xlu0 %779
      %v781 = vsel %vm536, %v757, 0.0
      %782 = vadd.xlane.f32.xlu0 %v781
      %v783 = vpop.xlane.xlu0 %782
      %v784 = vsel %vm536, %v758, 0.0
      %785 = vadd.xlane.f32.xlu0 %v784
      %v786 = vpop.xlane.xlu0 %785
      %v787 = vsel %vm536, %v759, 0.0
      %788 = vadd.xlane.f32.xlu0 %v787
      %v789 = vpop.xlane.xlu0 %788
      %v790 = vsel %vm536, %v760, 0.0
      %791 = vadd.xlane.f32.xlu0 %v790
      %v792 = vpop.xlane.xlu0 %791
      %v793 = vsel %vm536, %v761, 0.0
      %794 = vadd.xlane.f32.xlu0 %v793
      %v795 = vpop.xlane.xlu0 %794
      %v796 = vsel %vm536, %v762, 0.0
      %797 = vadd.xlane.f32.xlu0 %v796
      %v798 = vpop.xlane.xlu0 %797
      %v799 = vsel %vm536, %v763, 0.0
      %800 = vadd.xlane.f32.xlu0 %v799
      %v801 = vpop.xlane.xlu0 %800
      %v802 = vsel %vm536, %v764, 0.0
      %803 = vadd.xlane.f32.xlu0 %v802
      %v804 = vpop.xlane.xlu0 %803
      %v805 = vsel %vm536, %v765, 0.0
      %806 = vadd.xlane.f32.xlu0 %v805
      %v807 = vpop.xlane.xlu0 %806
      %v808 = vsel %vm536, %v766, 0.0
      %809 = vadd.xlane.f32.xlu0 %v808
      %v810 = vpop.xlane.xlu0 %809
      %v811 = vsel %vm536, %v767, 0.0
      %812 = vadd.xlane.f32.xlu0 %v811
      %v813 = vpop.xlane.xlu0 %812
      %v814 = vsel %vm536, %v768, 0.0
      %815 = vadd.xlane.f32.xlu0 %v814
      %v816 = vpop.xlane.xlu0 %815
      %v817 = vld [vmem:[#allocation2] sm:$0x1]
      %v819 = vlaneseq
      %v820 = vshrl.u32 %v819, 7
      %v821 = vsub.s32 0, %v820
      %v822 = vrot.slane %v817, %v821
      %v824 = vadd.f32 %v771, %v822
      %v825 = vadd.f32 %v774, %v822
      %v826 = vadd.f32 %v777, %v822
      %v827 = vadd.f32 %v780, %v822
      %v828 = vadd.f32 %v783, %v822
      %v829 = vadd.f32 %v786, %v822
      %v830 = vadd.f32 %v789, %v822
      %v831 = vadd.f32 %v792, %v822
      %v832 = vadd.f32 %v795, %v822
      %v833 = vadd.f32 %v798, %v822
      %v834 = vadd.f32 %v801, %v822
      %v835 = vadd.f32 %v804, %v822
      %v836 = vadd.f32 %v807, %v822
      %v837 = vadd.f32 %v810, %v822
      %v838 = vadd.f32 %v813, %v822
      %v839 = vadd.f32 %v816, %v822
      %vm840 = vcmask 7168
      %841 = vst.msk [vmem:[%s282] sm:$0xff] %vm840, %v824
      %842 = vst.msk [vmem:[%s282 + $0x8] sm:$0xff] %vm840, %v825
      %843 = vst.msk [vmem:[%s282 + $0x10] sm:$0xff] %vm840, %v826
      %844 = vst.msk [vmem:[%s282 + $0x18] sm:$0xff] %vm840, %v827
      %845 = vst.msk [vmem:[%s282 + $0x20] sm:$0xff] %vm840, %v828
      %846 = vst.msk [vmem:[%s282 + $0x28] sm:$0xff] %vm840, %v829
      %847 = vst.msk [vmem:[%s282 + $0x30] sm:$0xff] %vm840, %v830
      %848 = vst.msk [vmem:[%s282 + $0x38] sm:$0xff] %vm840, %v831
      %849 = vst.msk [vmem:[%s282 + $0x40] sm:$0xff] %vm840, %v832
      %850 = vst.msk [vmem:[%s282 + $0x48] sm:$0xff] %vm840, %v833
      %851 = vst.msk [vmem:[%s282 + $0x50] sm:$0xff] %vm840, %v834
      %852 = vst.msk [vmem:[%s282 + $0x58] sm:$0xff] %vm840, %v835
      %853 = vst.msk [vmem:[%s282 + $0x60] sm:$0xff] %vm840, %v836
      %854 = vst.msk [vmem:[%s282 + $0x68] sm:$0xff] %vm840, %v837
      %855 = vst.msk [vmem:[%s282 + $0x70] sm:$0xff] %vm840, %v838
      %856 = vst.msk [vmem:[%s282 + $0x78] sm:$0xff] %vm840, %v839
      %s857 = smul.u32 16, %s20
      %p858 = scmp.lt.s32.totalorder %s857, 63
      %s859 = scalar_select %p858, %s857, 63
      %s860 = smul.addr %s859, 8
      %s861 = scalar_lea.vmem %s7, %s860
      // Predicated region
      $region49: #{tpu_custom_call.1} parent=47 // pred_check
        %p862 = pneg %p190
      $region50: #{tpu_custom_call.1} parent=47 // pred_check_branch
        %864 = sbr.rel (%p862) target = $region52
      $region51: #{tpu_custom_call.1} parent=47 // pred_region
        %s865 = smul.u32 16, %s20
      $region52: #{tpu_custom_call.1} parent=47 // pred_fallthru
        _
    $region48: #{tpu_custom_call.1} parent=5 // pred_fallthru
      _
    %p866 = scmp.le.s32.totalorder 2, %s15
    // Predicated region
    $region53: #{tpu_custom_call.1} parent=5 // pred_check
      %p867 = pneg %p866
    $region54: #{tpu_custom_call.1} parent=5 // pred_check_branch
      %869 = sbr.rel (%p867) target = $region56
    $region55: #{tpu_custom_call.1} parent=5 // pred_region
      %s870 = ssub.s32 %s15, 2
      // Predicated region
      $region57: #{tpu_custom_call.1} parent=55 // pred_check
        %p871 = pneg %p196
      $region58: #{tpu_custom_call.1} parent=55 // pred_check_branch
        %873 = sbr.rel (%p871) target = $region60
      $region59: #{tpu_custom_call.1} parent=55 // pred_region
        %s874 = smul.u32 16, %s21
        %p875 = scmp.lt.s32.totalorder %s874, 63
        %s876 = scalar_select %p875, %s874, 63
        %s877 = smul.addr %s876, 8
        %s878 = scalar_lea.vmem %s7, %s877
      $region60: #{tpu_custom_call.1} parent=55 // pred_fallthru
        _
    $region56: #{tpu_custom_call.1} parent=5 // pred_fallthru
      _
  $region6: #{tpu_custom_call.1} parent=0 // loop_footer
    %s19 = sadd.s32 1, %s15
  $region7: #{tpu_custom_call.1} parent=0 // loop_footer_branch
    %14 = sbr.rel target = $region3
  $region8: #{tpu_custom_call.1} parent=0 // loop_exit
    _

</llo_original>
